<compile_context>
chip_gen: v7x
topology: tpu7x:2x2x1
jax: 0.10.0
libtpu: 0.0.40
codegen_flags: <defaults>
</compile_context>

<pallas_src>
from functools import partial

import jax
import jax.numpy as jnp
from jax.experimental import pallas as pl
from jax.experimental.pallas import tpu as pltpu

_D_IN = 19
_D_IN_PAD = 32          # pad K of layer 1 to a bf16-friendly multiple
_HIDDEN = 256
_D_OUT = 40
_LANE = 128
_D_OUT_PAD = _LANE      # pad last layer's output to a full lane-dense block


def _round_up(n, m):
    return ((n + m - 1) // m) * m


def _cdiv(a, b):
    return -(-a // b)


# ----------------------------------------------------------------------------
# Kernel: whole forward pass (4 matmuls + ReLUs + sigmoid) per batch tile.
# Matmul operands bf16, accumulation / bias / ReLU / sigmoid in f32,
# output stored bf16 (lane-dense padded block).
# ----------------------------------------------------------------------------
def _mlp_kernel(x_ref,
                w1_ref, b1_ref,
                w2_ref, b2_ref,
                w3_ref, b3_ref,
                w4_ref, b4_ref,
                o_ref):
    x = x_ref[...]                                               # bf16 [tb, 32]

    h = jnp.dot(x, w1_ref[...], preferred_element_type=jnp.float32) + b1_ref[...]
    h = jnp.maximum(h, 0.0)

    h = jnp.dot(h.astype(jnp.bfloat16), w2_ref[...],
                preferred_element_type=jnp.float32) + b2_ref[...]
    h = jnp.maximum(h, 0.0)

    h = jnp.dot(h.astype(jnp.bfloat16), w3_ref[...],
                preferred_element_type=jnp.float32) + b3_ref[...]
    h = jnp.maximum(h, 0.0)

    logits = jnp.dot(h.astype(jnp.bfloat16), w4_ref[...],
                     preferred_element_type=jnp.float32) + b4_ref[...]

    # sigmoid(x) = 0.5 * tanh(x/2) + 0.5  (EUP tanh; exactly bounded in [0,1])
    o_ref[...] = (0.5 * jnp.tanh(0.5 * logits) + 0.5).astype(o_ref.dtype)


# ----------------------------------------------------------------------------
# One-time parameter preparation (outside the per-call hot path):
#   - weights -> bf16, stored [in, out]
#   - biases  -> f32, shape (1, out)   (1-D torch-style biases accepted)
#   - w1 K-padded 19 -> 32, w4/b4 out-padded 40 -> 128
# ----------------------------------------------------------------------------
def prepare_params(params):
    def bias2d(b):
        b = jnp.asarray(b, jnp.float32)
        return b.reshape(1, -1)

    w1 = jnp.asarray(params["w1"], jnp.float32)
    w4 = jnp.asarray(params["w4"], jnp.float32)
    d_in, _ = w1.shape
    _, d_out = w4.shape
    assert d_in == _D_IN and d_out == _D_OUT, (d_in, d_out)

    prepped = {
        "w1": jnp.pad(w1, ((0, _D_IN_PAD - _D_IN), (0, 0))).astype(jnp.bfloat16),
        "w2": jnp.asarray(params["w2"]).astype(jnp.bfloat16),
        "w3": jnp.asarray(params["w3"]).astype(jnp.bfloat16),
        "w4": jnp.pad(w4, ((0, 0), (0, _D_OUT_PAD - _D_OUT))).astype(jnp.bfloat16),
        "b1": bias2d(params["b1"]),
        "b2": bias2d(params["b2"]),
        "b3": bias2d(params["b3"]),
        "b4": jnp.pad(bias2d(params["b4"]), ((0, 0), (0, _D_OUT_PAD - _D_OUT))),
    }
    return prepped


# ----------------------------------------------------------------------------
# Forward pass.  `params` must come from prepare_params().
# ----------------------------------------------------------------------------
@partial(jax.jit, static_argnames=("tb",))
def discriminator_forward(x, params, *, tb=2048):
    """x: [B, 19] float32 -> [B, 40] float32 sigmoid probabilities."""
    B, d_in = x.shape
    assert d_in == _D_IN, d_in

    # ---- batch tiling ---------------------------------------------------------
    # Small batches collapse to a single grid step; large batches use big tiles
    # but always >=2 steps so v7x's two TensorCores both get work.
    b_pad = _round_up(B, 16)
    if b_pad <= 256:
        tb_eff = b_pad
        n_steps = 1
    else:
        n_steps = max(2, _cdiv(b_pad, tb))
        tb_eff = _round_up(_cdiv(b_pad, n_steps), 16)
        b_pad = n_steps * tb_eff

    # Pad batch and K-dim (19 -> 32); cast to bf16.  Under jit these fuse into
    # a single cheap fusion producing the kernel's bf16 input.
    x_bf = jnp.pad(x, ((0, b_pad - B), (0, _D_IN_PAD - _D_IN))).astype(jnp.bfloat16)

    w1, w2, w3, w4 = params["w1"], params["w2"], params["w3"], params["w4"]
    b1, b2, b3, b4 = params["b1"], params["b2"], params["b3"], params["b4"]

    def full_spec(shape):
        # Weights/biases: whole array resident every step (constant index map,
        # DMA'd once and reused across the batch grid).
        return pl.BlockSpec(shape, lambda i: tuple(0 for _ in shape))

    out = pl.pallas_call(
        _mlp_kernel,
        out_shape=jax.ShapeDtypeStruct((b_pad, _D_OUT_PAD), jnp.bfloat16),
        grid_spec=pltpu.PrefetchScalarGridSpec(
            num_scalar_prefetch=0,
            grid=(n_steps,),
            in_specs=[
                pl.BlockSpec((tb_eff, _D_IN_PAD), lambda i: (i, 0)),   # x tile
                full_spec(w1.shape), full_spec(b1.shape),
                full_spec(w2.shape), full_spec(b2.shape),
                full_spec(w3.shape), full_spec(b3.shape),
                full_spec(w4.shape), full_spec(b4.shape),
            ],
            out_specs=pl.BlockSpec((tb_eff, _D_OUT_PAD), lambda i: (i, 0)),
        ),
        compiler_params=pltpu.CompilerParams(
            dimension_semantics=("parallel",),
            vmem_limit_bytes=32 * 1024 * 1024,
        ),
    )(x_bf, w1, b1, w2, b2, w3, b3, w4, b4)

    # Slice off padding and return f32 (fuses with the call under jit).
    return out[:B, :_D_OUT].astype(jnp.float32)


# ----------------------------------------------------------------------------
# Init / reference
# ----------------------------------------------------------------------------
def init_params(key):
    """nn.Linear-style init: U(-1/sqrt(fan_in), 1/sqrt(fan_in)).
    Weights stored as [in, out] (transposed vs torch's [out, in]); biases 1-D."""
    dims = [(_D_IN, _HIDDEN), (_HIDDEN, _HIDDEN), (_HIDDEN, _HIDDEN), (_HIDDEN, _D_OUT)]
    params = {}
    for idx, (fan_in, fan_out) in enumerate(dims, start=1):
        key, kw, kb = jax.random.split(key, 3)
        bound = 1.0 / (fan_in ** 0.5)
        params[f"w{idx}"] = jax.random.uniform(
            kw, (fan_in, fan_out), jnp.float32, minval=-bound, maxval=bound)
        params[f"b{idx}"] = jax.random.uniform(
            kb, (fan_out,), jnp.float32, minval=-bound, maxval=bound)
    return params


def _reference_forward(x, params):
    h = jnp.maximum(x @ params["w1"] + params["b1"], 0.0)
    h = jnp.maximum(h @ params["w2"] + params["b2"], 0.0)
    h = jnp.maximum(h @ params["w3"] + params["b3"], 0.0)
    return jax.nn.sigmoid(h @ params["w4"] + params["b4"])


if __name__ == "__main__":
    key = jax.random.PRNGKey(0)
    key, kx = jax.random.split(key)
    params = init_params(key)
    prepped = prepare_params(params)   # one-time conversion (outside hot path)

    # Small batch: single grid step.
    B = 16
    x = jax.random.normal(kx, (B, _D_IN), jnp.float32)
    out = jax.block_until_ready(discriminator_forward(x, prepped))
    ref = _reference_forward(x, params)
    assert out.shape == (B, _D_OUT), out.shape
    # bf16 matmul operands + bf16 output -> loosened tolerance vs f32 ref.
    assert float(jnp.max(jnp.abs(out - ref))) < 3e-2, float(jnp.max(jnp.abs(out - ref)))
    assert bool(jnp.all((out >= 0.0) & (out <= 1.0)))

    # Larger batch not divisible by 16: exercises padding + multi-step grid
    # (>=2 steps, so v7x dual-TC path is also covered).
    key, kx2 = jax.random.split(key)
    B2 = 300
    x2 = jax.random.normal(kx2, (B2, _D_IN), jnp.float32)
    out2 = jax.block_until_ready(discriminator_forward(x2, prepped))
    ref2 = _reference_forward(x2, params)
    assert out2.shape == (B2, _D_OUT), out2.shape
    assert float(jnp.max(jnp.abs(out2 - ref2))) < 3e-2, float(jnp.max(jnp.abs(out2 - ref2)))
    assert bool(jnp.all((out2 >= 0.0) & (out2 <= 1.0)))

    print("KERNEL_OK")
</pallas_src>

<mosaic_0001>
module attributes {stable_mosaic.version = 11 : i64} {
  func.func @_mlp_kernel(%arg0: i32, %arg1: memref<16x32xbf16, #tpu.memory_space<vmem>>, %arg2: memref<32x256xbf16, #tpu.memory_space<vmem>>, %arg3: memref<1x256xf32, #tpu.memory_space<vmem>>, %arg4: memref<256x256xbf16, #tpu.memory_space<vmem>>, %arg5: memref<1x256xf32, #tpu.memory_space<vmem>>, %arg6: memref<256x256xbf16, #tpu.memory_space<vmem>>, %arg7: memref<1x256xf32, #tpu.memory_space<vmem>>, %arg8: memref<256x128xbf16, #tpu.memory_space<vmem>>, %arg9: memref<1x128xf32, #tpu.memory_space<vmem>>, %arg10: memref<16x128xbf16, #tpu.memory_space<vmem>>) attributes {dimension_semantics = [#tpu.dimension_semantics<parallel>], iteration_bounds = array<i64: 1>, scalar_prefetch = 0 : i64, scratch_operands = 0 : i64, tpu.core_type = #tpu.core_type<tc>, window_params = [{transform_indices = @transform_0, window_bounds = array<i64: 16, 32>}, {pipeline_mode = #tpu.pipeline_mode<synchronous>, transform_indices = @transform_1, window_bounds = array<i64: 32, 256>}, {pipeline_mode = #tpu.pipeline_mode<synchronous>, transform_indices = @transform_2, window_bounds = array<i64: 1, 256>}, {pipeline_mode = #tpu.pipeline_mode<synchronous>, transform_indices = @transform_3, window_bounds = array<i64: 256, 256>}, {pipeline_mode = #tpu.pipeline_mode<synchronous>, transform_indices = @transform_4, window_bounds = array<i64: 1, 256>}, {pipeline_mode = #tpu.pipeline_mode<synchronous>, transform_indices = @transform_5, window_bounds = array<i64: 256, 256>}, {pipeline_mode = #tpu.pipeline_mode<synchronous>, transform_indices = @transform_6, window_bounds = array<i64: 1, 256>}, {pipeline_mode = #tpu.pipeline_mode<synchronous>, transform_indices = @transform_7, window_bounds = array<i64: 256, 128>}, {pipeline_mode = #tpu.pipeline_mode<synchronous>, transform_indices = @transform_8, window_bounds = array<i64: 1, 128>}, {transform_indices = @transform_9, window_bounds = array<i64: 16, 128>}]} {
    %c0 = arith.constant 0 : index
    %c0_0 = arith.constant 0 : index
    %0 = vector.load %arg1[%c0, %c0_0] : memref<16x32xbf16, #tpu.memory_space<vmem>>, vector<16x32xbf16>
    %c0_1 = arith.constant 0 : index
    %c0_2 = arith.constant 0 : index
    %1 = vector.load %arg2[%c0_1, %c0_2] : memref<32x256xbf16, #tpu.memory_space<vmem>>, vector<32x256xbf16>
    %cst = arith.constant dense<0.000000e+00> : vector<16x256xf32>
    %2 = tpu.matmul %0, %1, %cst {dimension_numbers = #tpu.dot_dimension_numbers<[1], [0], [0], [1], [0, 0, 1, 1], [], []>} : vector<16x32xbf16>, vector<32x256xbf16>, vector<16x256xf32> -> vector<16x256xf32>
    %c0_3 = arith.constant 0 : index
    %c0_4 = arith.constant 0 : index
    %3 = vector.load %arg3[%c0_3, %c0_4] : memref<1x256xf32, #tpu.memory_space<vmem>>, vector<1x256xf32>
    %4 = vector.broadcast %3 : vector<1x256xf32> to vector<16x256xf32>
    %5 = arith.addf %2, %4 : vector<16x256xf32>
    %cst_5 = arith.constant 0.000000e+00 : f32
    %6 = vector.broadcast %cst_5 : f32 to vector<16x256xf32>
    %7 = arith.maximumf %5, %6 : vector<16x256xf32>
    %8 = arith.truncf %7 : vector<16x256xf32> to vector<16x256xbf16>
    %c0_6 = arith.constant 0 : index
    %c0_7 = arith.constant 0 : index
    %9 = vector.load %arg4[%c0_6, %c0_7] : memref<256x256xbf16, #tpu.memory_space<vmem>>, vector<256x256xbf16>
    %cst_8 = arith.constant dense<0.000000e+00> : vector<16x256xf32>
    %10 = tpu.matmul %8, %9, %cst_8 {dimension_numbers = #tpu.dot_dimension_numbers<[1], [0], [0], [1], [0, 0, 1, 1], [], []>} : vector<16x256xbf16>, vector<256x256xbf16>, vector<16x256xf32> -> vector<16x256xf32>
    %c0_9 = arith.constant 0 : index
    %c0_10 = arith.constant 0 : index
    %11 = vector.load %arg5[%c0_9, %c0_10] : memref<1x256xf32, #tpu.memory_space<vmem>>, vector<1x256xf32>
    %12 = vector.broadcast %11 : vector<1x256xf32> to vector<16x256xf32>
    %13 = arith.addf %10, %12 : vector<16x256xf32>
    %cst_11 = arith.constant 0.000000e+00 : f32
    %14 = vector.broadcast %cst_11 : f32 to vector<16x256xf32>
    %15 = arith.maximumf %13, %14 : vector<16x256xf32>
    %16 = arith.truncf %15 : vector<16x256xf32> to vector<16x256xbf16>
    %c0_12 = arith.constant 0 : index
    %c0_13 = arith.constant 0 : index
    %17 = vector.load %arg6[%c0_12, %c0_13] : memref<256x256xbf16, #tpu.memory_space<vmem>>, vector<256x256xbf16>
    %cst_14 = arith.constant dense<0.000000e+00> : vector<16x256xf32>
    %18 = tpu.matmul %16, %17, %cst_14 {dimension_numbers = #tpu.dot_dimension_numbers<[1], [0], [0], [1], [0, 0, 1, 1], [], []>} : vector<16x256xbf16>, vector<256x256xbf16>, vector<16x256xf32> -> vector<16x256xf32>
    %c0_15 = arith.constant 0 : index
    %c0_16 = arith.constant 0 : index
    %19 = vector.load %arg7[%c0_15, %c0_16] : memref<1x256xf32, #tpu.memory_space<vmem>>, vector<1x256xf32>
    %20 = vector.broadcast %19 : vector<1x256xf32> to vector<16x256xf32>
    %21 = arith.addf %18, %20 : vector<16x256xf32>
    %cst_17 = arith.constant 0.000000e+00 : f32
    %22 = vector.broadcast %cst_17 : f32 to vector<16x256xf32>
    %23 = arith.maximumf %21, %22 : vector<16x256xf32>
    %24 = arith.truncf %23 : vector<16x256xf32> to vector<16x256xbf16>
    %c0_18 = arith.constant 0 : index
    %c0_19 = arith.constant 0 : index
    %25 = vector.load %arg8[%c0_18, %c0_19] : memref<256x128xbf16, #tpu.memory_space<vmem>>, vector<256x128xbf16>
    %cst_20 = arith.constant dense<0.000000e+00> : vector<16x128xf32>
    %26 = tpu.matmul %24, %25, %cst_20 {dimension_numbers = #tpu.dot_dimension_numbers<[1], [0], [0], [1], [0, 0, 1, 1], [], []>} : vector<16x256xbf16>, vector<256x128xbf16>, vector<16x128xf32> -> vector<16x128xf32>
    %c0_21 = arith.constant 0 : index
    %c0_22 = arith.constant 0 : index
    %27 = vector.load %arg9[%c0_21, %c0_22] : memref<1x128xf32, #tpu.memory_space<vmem>>, vector<1x128xf32>
    %28 = vector.broadcast %27 : vector<1x128xf32> to vector<16x128xf32>
    %29 = arith.addf %26, %28 : vector<16x128xf32>
    %cst_23 = arith.constant 5.000000e-01 : f32
    %30 = vector.broadcast %cst_23 : f32 to vector<16x128xf32>
    %31 = arith.mulf %30, %29 : vector<16x128xf32>
    %32 = math.tanh %31 : vector<16x128xf32>
    %cst_24 = arith.constant 5.000000e-01 : f32
    %33 = vector.broadcast %cst_24 : f32 to vector<16x128xf32>
    %34 = arith.mulf %33, %32 : vector<16x128xf32>
    %cst_25 = arith.constant 5.000000e-01 : f32
    %35 = vector.broadcast %cst_25 : f32 to vector<16x128xf32>
    %36 = arith.addf %34, %35 : vector<16x128xf32>
    %37 = arith.truncf %36 : vector<16x128xf32> to vector<16x128xbf16>
    %c0_26 = arith.constant 0 : index
    %c0_27 = arith.constant 0 : index
    %38 = vector.load %arg10[%c0_26, %c0_27] : memref<16x128xbf16, #tpu.memory_space<vmem>>, vector<16x128xbf16>
    tpu.vector_store %arg10[%c0_26, %c0_27], %37 {strides = array<i32>} : memref<16x128xbf16, #tpu.memory_space<vmem>>, vector<16x128xbf16>,
    return
  }
  func.func @transform_0(%arg0: i32) -> (i32, i32) {
    %c0_i32 = arith.constant 0 : i32
    %c0_i32_0 = arith.constant 0 : i32
    return %arg0, %c0_i32 : i32, i32
  }
  func.func @transform_1(%arg0: i32) -> (i32, i32) {
    %c0_i32 = arith.constant 0 : i32
    %c0_i32_0 = arith.constant 0 : i32
    %c0_i32_1 = arith.constant 0 : i32
    return %c0_i32, %c0_i32_0 : i32, i32
  }
  func.func @transform_2(%arg0: i32) -> (i32, i32) {
    %c0_i32 = arith.constant 0 : i32
    %c0_i32_0 = arith.constant 0 : i32
    %c0_i32_1 = arith.constant 0 : i32
    return %c0_i32, %c0_i32_0 : i32, i32
  }
  func.func @transform_3(%arg0: i32) -> (i32, i32) {
    %c0_i32 = arith.constant 0 : i32
    %c0_i32_0 = arith.constant 0 : i32
    %c0_i32_1 = arith.constant 0 : i32
    return %c0_i32, %c0_i32_0 : i32, i32
  }
  func.func @transform_4(%arg0: i32) -> (i32, i32) {
    %c0_i32 = arith.constant 0 : i32
    %c0_i32_0 = arith.constant 0 : i32
    %c0_i32_1 = arith.constant 0 : i32
    return %c0_i32, %c0_i32_0 : i32, i32
  }
  func.func @transform_5(%arg0: i32) -> (i32, i32) {
    %c0_i32 = arith.constant 0 : i32
    %c0_i32_0 = arith.constant 0 : i32
    %c0_i32_1 = arith.constant 0 : i32
    return %c0_i32, %c0_i32_0 : i32, i32
  }
  func.func @transform_6(%arg0: i32) -> (i32, i32) {
    %c0_i32 = arith.constant 0 : i32
    %c0_i32_0 = arith.constant 0 : i32
    %c0_i32_1 = arith.constant 0 : i32
    return %c0_i32, %c0_i32_0 : i32, i32
  }
  func.func @transform_7(%arg0: i32) -> (i32, i32) {
    %c0_i32 = arith.constant 0 : i32
    %c0_i32_0 = arith.constant 0 : i32
    %c0_i32_1 = arith.constant 0 : i32
    return %c0_i32, %c0_i32_0 : i32, i32
  }
  func.func @transform_8(%arg0: i32) -> (i32, i32) {
    %c0_i32 = arith.constant 0 : i32
    %c0_i32_0 = arith.constant 0 : i32
    %c0_i32_1 = arith.constant 0 : i32
    return %c0_i32, %c0_i32_0 : i32, i32
  }
  func.func @transform_9(%arg0: i32) -> (i32, i32) {
    %c0_i32 = arith.constant 0 : i32
    %c0_i32_0 = arith.constant 0 : i32
    return %arg0, %c0_i32 : i32, i32
  }
}

</mosaic_0001>

<llo_original>
// kernel: discriminator_forward.1
$region0: #{discriminator_forward.1}
  #allocation0 [shape = 'u32[]', space=smem, size = 0x4, offset = 0x4, fixed_abs, tag = 'smem constant byte address 0x4 - core index']
  #allocation1 [shape = 'u32[144,128]{1,0:T(1,128)}', space=vmem, size = 0x12000, scoped, tag = 'internal scratch']
  %s0 = inlined_call_operand.vmem [shape: bf16[16,32], index: 0, kind: input, shape index: {}]
  %s1 = inlined_call_operand.vmem [shape: bf16[32,256], index: 1, kind: input, shape index: {}]
  %s2 = inlined_call_operand.vmem [shape: f32[1,256], index: 2, kind: input, shape index: {}]
  %s3 = inlined_call_operand.hbm [shape: bf16[256,256], index: 3, kind: input, shape index: {}]
  %s4 = inlined_call_operand.vmem [shape: f32[1,256], index: 4, kind: input, shape index: {}]
  %s5 = inlined_call_operand.hbm [shape: bf16[256,256], index: 5, kind: input, shape index: {}]
  %s6 = inlined_call_operand.vmem [shape: f32[1,256], index: 6, kind: input, shape index: {}]
  %s7 = inlined_call_operand.hbm [shape: bf16[256,128], index: 7, kind: input, shape index: {}]
  %s8 = inlined_call_operand.vmem [shape: f32[1,128], index: 8, kind: input, shape index: {}]
  %s9 = inlined_call_operand.vmem [shape: bf16[16,128], index: 9, kind: output, shape index: {}]
  %s10 = sld [smem:[#allocation0]]
  $region58: #{discriminator_forward.1} parent=0
    _
  %s12 = ssub.s32 1, %s10
  %s13 = scalar_select 0, %s12, %s10
  $region1: #{discriminator_forward.1} parent=0
    #allocation2 [shape = 'u8[131072]{0}', space=vmem, size = 0x20000, scoped, tag = 'input window, operand 3, single buffered']
    #allocation3 [shape = 's32[1]{0}', space=sflag, size = 0x4, scoped, tag = 'scoped memory for discriminator_forward.1']
    #allocation4 [shape = 'u8[131072]{0}', space=vmem, size = 0x20000, scoped, tag = 'input window, operand 5, single buffered']
    #allocation5 [shape = 's32[1]{0}', space=sflag, size = 0x4, scoped, tag = 'scoped memory for discriminator_forward.1']
    #allocation6 [shape = 'u8[65536]{0}', space=vmem, size = 0x10000, scoped, tag = 'input window, operand 7, single buffered']
    %14 = vsyncpa [#allocation3], 0
    %15 = vsyncpa [#allocation5], 0
    // Predicated region
    $region2: #{discriminator_forward.1} parent=1 // pred_check
      _
    $region3: #{discriminator_forward.1} parent=1 // pred_check_branch
      %17 = sbr.rel (0) target = $region5
    $region4: #{discriminator_forward.1} parent=1 // pred_region
      _
    $region5: #{discriminator_forward.1} parent=1 // pred_fallthru
      _
    // Predicated region
    $region6: #{discriminator_forward.1} parent=1 // pred_check
      _
    $region7: #{discriminator_forward.1} parent=1 // pred_check_branch
      %19 = sbr.rel (0) target = $region9
    $region8: #{discriminator_forward.1} parent=1 // pred_region
      _
    $region9: #{discriminator_forward.1} parent=1 // pred_fallthru
      _
    // Predicated region
    $region10: #{discriminator_forward.1} parent=1 // pred_check
      _
    $region11: #{discriminator_forward.1} parent=1 // pred_check_branch
      %21 = sbr.rel (0) target = $region13
    $region12: #{discriminator_forward.1} parent=1 // pred_region
      _
    $region13: #{discriminator_forward.1} parent=1 // pred_fallthru
      _
    // Predicated region
    $region14: #{discriminator_forward.1} parent=1 // pred_check
      _
    $region15: #{discriminator_forward.1} parent=1 // pred_check_branch
      %23 = sbr.rel (0) target = $region17
    $region16: #{discriminator_forward.1} parent=1 // pred_region
      %s25 = ssub.s32 4096, 4096
      %26 = vsyncadd [#allocation3], %s25
      %s27 = sshll.u32 [#allocation2], 4
      %s28 = int_to_ptr.vmem [resolvable:$true] %s27
      %33 = dma.hbm_to_vmem [thread:$0]  %s3, 4096, %s28, [#allocation3], 128, 128, 8
    $region17: #{discriminator_forward.1} parent=1 // pred_fallthru
      _
    // Predicated region
    $region18: #{discriminator_forward.1} parent=1 // pred_check
      _
    $region19: #{discriminator_forward.1} parent=1 // pred_check_branch
      %35 = sbr.rel (0) target = $region21
    $region20: #{discriminator_forward.1} parent=1 // pred_region
      _
    $region21: #{discriminator_forward.1} parent=1 // pred_fallthru
      _
    // Predicated region
    $region22: #{discriminator_forward.1} parent=1 // pred_check
      _
    $region23: #{discriminator_forward.1} parent=1 // pred_check_branch
      %37 = sbr.rel (0) target = $region25
    $region24: #{discriminator_forward.1} parent=1 // pred_region
      %s39 = ssub.s32 4096, 4096
      %40 = vsyncadd [#allocation5], %s39
      %s41 = sshll.u32 [#allocation4], 4
      %s42 = int_to_ptr.vmem [resolvable:$true] %s41
      %47 = dma.hbm_to_vmem [thread:$0]  %s5, 4096, %s42, [#allocation5], 128, 128, 8
    $region25: #{discriminator_forward.1} parent=1 // pred_fallthru
      _
    // Predicated region
    $region26: #{discriminator_forward.1} parent=1 // pred_check
      _
    $region27: #{discriminator_forward.1} parent=1 // pred_check_branch
      %49 = sbr.rel (0) target = $region29
    $region28: #{discriminator_forward.1} parent=1 // pred_region
      _
    $region29: #{discriminator_forward.1} parent=1 // pred_fallthru
      _
    // Predicated region
    $region30: #{discriminator_forward.1} parent=1 // pred_check
      _
    $region31: #{discriminator_forward.1} parent=1 // pred_check_branch
      %51 = sbr.rel (0) target = $region33
    $region32: #{discriminator_forward.1} parent=1 // pred_region
      %s53 = ssub.s32 2048, 2048
      %54 = vsyncadd [#allocation5], %s53
      %s55 = sshll.u32 [#allocation6], 4
      %s56 = int_to_ptr.vmem [resolvable:$true] %s55
      %61 = dma.hbm_to_vmem [thread:$0]  %s7, 2048, %s56, [#allocation5], 64, 64, 4
    $region33: #{discriminator_forward.1} parent=1 // pred_fallthru
      _
    // Predicated region
    $region34: #{discriminator_forward.1} parent=1 // pred_check
      _
    $region35: #{discriminator_forward.1} parent=1 // pred_check_branch
      %63 = sbr.rel (0) target = $region37
    $region36: #{discriminator_forward.1} parent=1 // pred_region
      _
    $region37: #{discriminator_forward.1} parent=1 // pred_fallthru
      _
    // Predicated region
    $region38: #{discriminator_forward.1} parent=1 // pred_check
      _
    $region39: #{discriminator_forward.1} parent=1 // pred_check_branch
      %65 = sbr.rel (0) target = $region41
    $region40: #{discriminator_forward.1} parent=1 // pred_region
      %66 = dma.done [#allocation3], 4096
    $region41: #{discriminator_forward.1} parent=1 // pred_fallthru
      _
    // Predicated region
    $region42: #{discriminator_forward.1} parent=1 // pred_check
      _
    $region43: #{discriminator_forward.1} parent=1 // pred_check_branch
      %68 = sbr.rel (0) target = $region45
    $region44: #{discriminator_forward.1} parent=1 // pred_region
      %69 = dma.done [#allocation5], 4096
    $region45: #{discriminator_forward.1} parent=1 // pred_fallthru
      _
    // Predicated region
    $region46: #{discriminator_forward.1} parent=1 // pred_check
      _
    $region47: #{discriminator_forward.1} parent=1 // pred_check_branch
      %71 = sbr.rel (0) target = $region49
    $region48: #{discriminator_forward.1} parent=1 // pred_region
      %72 = dma.done [#allocation5], 2048
    $region49: #{discriminator_forward.1} parent=1 // pred_fallthru
      _
    %v74 = vld [vmem:[%s0] sm:$0xf]
    %v75 = vld [vmem:[%s0 + $0x4] sm:$0xf]
    %v76 = vld [vmem:[%s1] sm:$0xff]
    %v77 = vld [vmem:[%s1 + $0x8] sm:$0xff]
    %v78 = vld [vmem:[%s1 + $0x10] sm:$0xff]
    %v79 = vld [vmem:[%s1 + $0x18] sm:$0xff]
    %v80 = vld [vmem:[%s2] sm:$0x3]
    %v82 = vlaneseq
    %v83 = vshrl.u32 %v82, 7
    %v84 = vsub.s32 0, %v83
    %v85 = vrot.slane %v80, %v84
    %v86 = vlaneseq
    %v87 = vshrl.u32 %v86, 7
    %v88 = vsub.s32 1, %v87
    %v89 = vrot.slane %v80, %v88
    %v94 = vunpack.c.l.b16 %v74
    %v95 = vunpack.c.l.b16 %v75
    %v96 = vpack.c.b16 %v95, %v94
    %v101 = vunpack.c.l.b16 %v76
    %v102 = vunpack.c.h.b16 %v76
    %v103 = vunpack.c.l.b16 %v77
    %v104 = vunpack.c.h.b16 %v77
    %v105 = vunpack.c.l.b16 %v78
    %v106 = vunpack.c.h.b16 %v78
    %v107 = vunpack.c.l.b16 %v79
    %v108 = vunpack.c.h.b16 %v79
    %v109 = vpack.c.b16 %v103, %v101
    %v110 = vpack.c.b16 %v104, %v102
    %v111 = vpack.c.b16 %v107, %v105
    %v112 = vpack.c.b16 %v108, %v106
    %vm117 = vcmask 261120
    %v119 = vsel %vm117, %v96, 0
    %121 = vmatprep.subr.bf16.mxu0 %v110
    %122 = vmatpush1.bf16.msra.mxu0 %v109
    %123 = vmatprep.subr.bf16.mxu0 %v112
    %124 = vmatpush1.bf16.msra.mxu0 %v111
    %125 = vmatprep.subr.bf16.mxu0 0
    %126 = vmatpush1.bf16.msra.mxu0 0
    %127 = vmatprep.subr.bf16.mxu0 0
    %128 = vmatpush1.bf16.msra.mxu0 0
    %129 = vmatprep.subr.bf16.mxu0 0
    %130 = vmatpush1.bf16.msra.mxu0 0
    %131 = vmatprep.subr.bf16.mxu0 0
    %132 = vmatpush1.bf16.msra.mxu0 0
    %133 = vmatprep.subr.bf16.mxu0 0
    %134 = vmatpush1.bf16.msra.mxu0 0
    %135 = vmatprep.subr.bf16.mxu0 0
    %136 = vmatpush1.bf16.msra.mxu0 0
    %137 = vmatprep.subr.bf16.mxu0 0
    %138 = vmatpush1.bf16.msra.mxu0 0
    %139 = vmatprep.subr.bf16.mxu0 0
    %140 = vmatpush1.bf16.msra.mxu0 0
    %141 = vmatprep.subr.bf16.mxu0 0
    %142 = vmatpush1.bf16.msra.mxu0 0
    %143 = vmatprep.subr.bf16.mxu0 0
    %144 = vmatpush1.bf16.msra.mxu0 0
    %145 = vmatprep.subr.bf16.mxu0 0
    %146 = vmatpush1.bf16.msra.mxu0 0
    %147 = vmatprep.subr.bf16.mxu0 0
    %148 = vmatpush1.bf16.msra.mxu0 0
    %149 = vmatprep.subr.bf16.mxu0 0
    %150 = vmatpush1.bf16.msra.mxu0 0
    %151 = vmatprep.subr.bf16.mxu0 0
    %152 = vmatpush1.bf16.msra.mxu0 0
    %153 = vmatprep.mubr.bf16.mxu0 0
    %154 = vmatmul.mubr.bf16.gmra.mrb[0].mxu0 %v119
    %v155 = vpop.f32.mrb[0].mxu0
    %v156 = vadd.f32 %v85, %v155
    %v157 = vpop.f32.mrb[0].mxu0
    %v158 = vadd.f32 %v89, %v157
    %v159 = vpop.f32.mrb[0].mxu0
    %v160 = vadd.f32 %v85, %v159
    %v161 = vpop.f32.mrb[0].mxu0
    %v162 = vadd.f32 %v89, %v161
    %163 = vdwg.mxu0
    %v164 = vmax.f32 %v156, 0.0
    %v165 = vmax.f32 %v158, 0.0
    %v166 = vmax.f32 %v160, 0.0
    %v167 = vmax.f32 %v162, 0.0
    %v168 = vpack.c.bf16 %v166, %v164
    %v169 = vpack.c.bf16 %v167, %v165
    %v170 = vld [vmem:[#allocation2] sm:$0xff]
    %v171 = vld [vmem:[#allocation2 + $0x8] sm:$0xff]
    %v172 = vld [vmem:[#allocation2 + $0x10] sm:$0xff]
    %v173 = vld [vmem:[#allocation2 + $0x18] sm:$0xff]
    %v174 = vld [vmem:[#allocation2 + $0x20] sm:$0xff]
    %v175 = vld [vmem:[#allocation2 + $0x28] sm:$0xff]
    %v176 = vld [vmem:[#allocation2 + $0x30] sm:$0xff]
    %v177 = vld [vmem:[#allocation2 + $0x38] sm:$0xff]
    %v178 = vld [vmem:[#allocation2 + $0x40] sm:$0xff]
    %v179 = vld [vmem:[#allocation2 + $0x48] sm:$0xff]
    %v180 = vld [vmem:[#allocation2 + $0x50] sm:$0xff]
    %v181 = vld [vmem:[#allocation2 + $0x58] sm:$0xff]
    %v182 = vld [vmem:[#allocation2 + $0x60] sm:$0xff]
    %v183 = vld [vmem:[#allocation2 + $0x68] sm:$0xff]
    %v184 = vld [vmem:[#allocation2 + $0x70] sm:$0xff]
    %v185 = vld [vmem:[#allocation2 + $0x78] sm:$0xff]
    %v186 = vld [vmem:[#allocation2 + $0x80] sm:$0xff]
    %v187 = vld [vmem:[#allocation2 + $0x88] sm:$0xff]
    %v188 = vld [vmem:[#allocation2 + $0x90] sm:$0xff]
    %v189 = vld [vmem:[#allocation2 + $0x98] sm:$0xff]
    %v190 = vld [vmem:[#allocation2 + $0xa0] sm:$0xff]
    %v191 = vld [vmem:[#allocation2 + $0xa8] sm:$0xff]
    %v192 = vld [vmem:[#allocation2 + $0xb0] sm:$0xff]
    %v193 = vld [vmem:[#allocation2 + $0xb8] sm:$0xff]
    %v194 = vld [vmem:[#allocation2 + $0xc0] sm:$0xff]
    %v195 = vld [vmem:[#allocation2 + $0xc8] sm:$0xff]
    %v196 = vld [vmem:[#allocation2 + $0xd0] sm:$0xff]
    %v197 = vld [vmem:[#allocation2 + $0xd8] sm:$0xff]
    %v198 = vld [vmem:[#allocation2 + $0xe0] sm:$0xff]
    %v199 = vld [vmem:[#allocation2 + $0xe8] sm:$0xff]
    %v200 = vld [vmem:[#allocation2 + $0xf0] sm:$0xff]
    %v201 = vld [vmem:[#allocation2 + $0xf8] sm:$0xff]
    %v202 = vld [vmem:[%s4] sm:$0x3]
    %v204 = vlaneseq
    %v205 = vshrl.u32 %v204, 7
    %v206 = vsub.s32 0, %v205
    %v207 = vrot.slane %v202, %v206
    %v208 = vlaneseq
    %v209 = vshrl.u32 %v208, 7
    %v210 = vsub.s32 1, %v209
    %v211 = vrot.slane %v202, %v210
    %v246 = vunpack.c.l.b16 %v170
    %v247 = vunpack.c.h.b16 %v170
    %v248 = vunpack.c.l.b16 %v171
    %v249 = vunpack.c.h.b16 %v171
    %v250 = vunpack.c.l.b16 %v172
    %v251 = vunpack.c.h.b16 %v172
    %v252 = vunpack.c.l.b16 %v173
    %v253 = vunpack.c.h.b16 %v173
    %v254 = vunpack.c.l.b16 %v174
    %v255 = vunpack.c.h.b16 %v174
    %v256 = vunpack.c.l.b16 %v175
    %v257 = vunpack.c.h.b16 %v175
    %v258 = vunpack.c.l.b16 %v176
    %v259 = vunpack.c.h.b16 %v176
    %v260 = vunpack.c.l.b16 %v177
    %v261 = vunpack.c.h.b16 %v177
    %v262 = vunpack.c.l.b16 %v178
    %v263 = vunpack.c.h.b16 %v178
    %v264 = vunpack.c.l.b16 %v179
    %v265 = vunpack.c.h.b16 %v179
    %v266 = vunpack.c.l.b16 %v180
    %v267 = vunpack.c.h.b16 %v180
    %v268 = vunpack.c.l.b16 %v181
    %v269 = vunpack.c.h.b16 %v181
    %v270 = vunpack.c.l.b16 %v182
    %v271 = vunpack.c.h.b16 %v182
    %v272 = vunpack.c.l.b16 %v183
    %v273 = vunpack.c.h.b16 %v183
    %v274 = vunpack.c.l.b16 %v184
    %v275 = vunpack.c.h.b16 %v184
    %v276 = vunpack.c.l.b16 %v185
    %v277 = vunpack.c.h.b16 %v185
    %v278 = vunpack.c.l.b16 %v186
    %v279 = vunpack.c.h.b16 %v186
    %v280 = vunpack.c.l.b16 %v187
    %v281 = vunpack.c.h.b16 %v187
    %v282 = vunpack.c.l.b16 %v188
    %v283 = vunpack.c.h.b16 %v188
    %v284 = vunpack.c.l.b16 %v189
    %v285 = vunpack.c.h.b16 %v189
    %v286 = vunpack.c.l.b16 %v190
    %v287 = vunpack.c.h.b16 %v190
    %v288 = vunpack.c.l.b16 %v191
    %v289 = vunpack.c.h.b16 %v191
    %v290 = vunpack.c.l.b16 %v192
    %v291 = vunpack.c.h.b16 %v192
    %v292 = vunpack.c.l.b16 %v193
    %v293 = vunpack.c.h.b16 %v193
    %v294 = vunpack.c.l.b16 %v194
    %v295 = vunpack.c.h.b16 %v194
    %v296 = vunpack.c.l.b16 %v195
    %v297 = vunpack.c.h.b16 %v195
    %v298 = vunpack.c.l.b16 %v196
    %v299 = vunpack.c.h.b16 %v196
    %v300 = vunpack.c.l.b16 %v197
    %v301 = vunpack.c.h.b16 %v197
    %v302 = vunpack.c.l.b16 %v198
    %v303 = vunpack.c.h.b16 %v198
    %v304 = vunpack.c.l.b16 %v199
    %v305 = vunpack.c.h.b16 %v199
    %v306 = vunpack.c.l.b16 %v200
    %v307 = vunpack.c.h.b16 %v200
    %v308 = vunpack.c.l.b16 %v201
    %v309 = vunpack.c.h.b16 %v201
    %v310 = vpack.c.b16 %v248, %v246
    %v311 = vpack.c.b16 %v249, %v247
    %v312 = vpack.c.b16 %v252, %v250
    %v313 = vpack.c.b16 %v253, %v251
    %v314 = vpack.c.b16 %v256, %v254
    %v315 = vpack.c.b16 %v257, %v255
    %v316 = vpack.c.b16 %v260, %v258
    %v317 = vpack.c.b16 %v261, %v259
    %v318 = vpack.c.b16 %v264, %v262
    %v319 = vpack.c.b16 %v265, %v263
    %v320 = vpack.c.b16 %v268, %v266
    %v321 = vpack.c.b16 %v269, %v267
    %v322 = vpack.c.b16 %v272, %v270
    %v323 = vpack.c.b16 %v273, %v271
    %v324 = vpack.c.b16 %v276, %v274
    %v325 = vpack.c.b16 %v277, %v275
    %v326 = vpack.c.b16 %v280, %v278
    %v327 = vpack.c.b16 %v281, %v279
    %v328 = vpack.c.b16 %v284, %v282
    %v329 = vpack.c.b16 %v285, %v283
    %v330 = vpack.c.b16 %v288, %v286
    %v331 = vpack.c.b16 %v289, %v287
    %v332 = vpack.c.b16 %v292, %v290
    %v333 = vpack.c.b16 %v293, %v291
    %v334 = vpack.c.b16 %v296, %v294
    %v335 = vpack.c.b16 %v297, %v295
    %v336 = vpack.c.b16 %v300, %v298
    %v337 = vpack.c.b16 %v301, %v299
    %v338 = vpack.c.b16 %v304, %v302
    %v339 = vpack.c.b16 %v305, %v303
    %v340 = vpack.c.b16 %v308, %v306
    %v341 = vpack.c.b16 %v309, %v307
    %374 = vmatprep.subr.bf16.mxu0 %v311
    %375 = vmatpush1.bf16.msra.mxu0 %v310
    %376 = vmatprep.subr.bf16.mxu0 %v313
    %377 = vmatpush1.bf16.msra.mxu0 %v312
    %378 = vmatprep.subr.bf16.mxu0 %v315
    %379 = vmatpush1.bf16.msra.mxu0 %v314
    %380 = vmatprep.subr.bf16.mxu0 %v317
    %381 = vmatpush1.bf16.msra.mxu0 %v316
    %382 = vmatprep.subr.bf16.mxu0 %v319
    %383 = vmatpush1.bf16.msra.mxu0 %v318
    %384 = vmatprep.subr.bf16.mxu0 %v321
    %385 = vmatpush1.bf16.msra.mxu0 %v320
    %386 = vmatprep.subr.bf16.mxu0 %v323
    %387 = vmatpush1.bf16.msra.mxu0 %v322
    %388 = vmatprep.subr.bf16.mxu0 %v325
    %389 = vmatpush1.bf16.msra.mxu0 %v324
    %390 = vmatprep.subr.bf16.mxu0 %v327
    %391 = vmatpush1.bf16.msra.mxu0 %v326
    %392 = vmatprep.subr.bf16.mxu0 %v329
    %393 = vmatpush1.bf16.msra.mxu0 %v328
    %394 = vmatprep.subr.bf16.mxu0 %v331
    %395 = vmatpush1.bf16.msra.mxu0 %v330
    %396 = vmatprep.subr.bf16.mxu0 %v333
    %397 = vmatpush1.bf16.msra.mxu0 %v332
    %398 = vmatprep.subr.bf16.mxu0 %v335
    %399 = vmatpush1.bf16.msra.mxu0 %v334
    %400 = vmatprep.subr.bf16.mxu0 %v337
    %401 = vmatpush1.bf16.msra.mxu0 %v336
    %402 = vmatprep.subr.bf16.mxu0 %v339
    %403 = vmatpush1.bf16.msra.mxu0 %v338
    %404 = vmatprep.subr.bf16.mxu0 %v341
    %405 = vmatpush1.bf16.msra.mxu0 %v340
    %406 = vmatprep.mubr.bf16.mxu0 %v169
    %407 = vmatmul.mubr.bf16.gmra.mrb[0].mxu0 %v168
    %v408 = vpop.f32.mrb[0].mxu0
    %v409 = vadd.f32 %v207, %v408
    %v410 = vpop.f32.mrb[0].mxu0
    %v411 = vadd.f32 %v211, %v410
    %v412 = vpop.f32.mrb[0].mxu0
    %v413 = vadd.f32 %v207, %v412
    %v414 = vpop.f32.mrb[0].mxu0
    %v415 = vadd.f32 %v211, %v414
    %416 = vdwg.mxu0
    %v417 = vmax.f32 %v409, 0.0
    %v418 = vmax.f32 %v411, 0.0
    %v419 = vmax.f32 %v413, 0.0
    %v420 = vmax.f32 %v415, 0.0
    %v421 = vpack.c.bf16 %v419, %v417
    %v422 = vpack.c.bf16 %v420, %v418
    %v423 = vld [vmem:[#allocation4] sm:$0xff]
    %v424 = vld [vmem:[#allocation4 + $0x8] sm:$0xff]
    %v425 = vld [vmem:[#allocation4 + $0x10] sm:$0xff]
    %v426 = vld [vmem:[#allocation4 + $0x18] sm:$0xff]
    %v427 = vld [vmem:[#allocation4 + $0x20] sm:$0xff]
    %v428 = vld [vmem:[#allocation4 + $0x28] sm:$0xff]
    %v429 = vld [vmem:[#allocation4 + $0x30] sm:$0xff]
    %v430 = vld [vmem:[#allocation4 + $0x38] sm:$0xff]
    %v431 = vld [vmem:[#allocation4 + $0x40] sm:$0xff]
    %v432 = vld [vmem:[#allocation4 + $0x48] sm:$0xff]
    %v433 = vld [vmem:[#allocation4 + $0x50] sm:$0xff]
    %v434 = vld [vmem:[#allocation4 + $0x58] sm:$0xff]
    %v435 = vld [vmem:[#allocation4 + $0x60] sm:$0xff]
    %v436 = vld [vmem:[#allocation4 + $0x68] sm:$0xff]
    %v437 = vld [vmem:[#allocation4 + $0x70] sm:$0xff]
    %v438 = vld [vmem:[#allocation4 + $0x78] sm:$0xff]
    %v439 = vld [vmem:[#allocation4 + $0x80] sm:$0xff]
    %v440 = vld [vmem:[#allocation4 + $0x88] sm:$0xff]
    %v441 = vld [vmem:[#allocation4 + $0x90] sm:$0xff]
    %v442 = vld [vmem:[#allocation4 + $0x98] sm:$0xff]
    %v443 = vld [vmem:[#allocation4 + $0xa0] sm:$0xff]
    %v444 = vld [vmem:[#allocation4 + $0xa8] sm:$0xff]
    %v445 = vld [vmem:[#allocation4 + $0xb0] sm:$0xff]
    %v446 = vld [vmem:[#allocation4 + $0xb8] sm:$0xff]
    %v447 = vld [vmem:[#allocation4 + $0xc0] sm:$0xff]
    %v448 = vld [vmem:[#allocation4 + $0xc8] sm:$0xff]
    %v449 = vld [vmem:[#allocation4 + $0xd0] sm:$0xff]
    %v450 = vld [vmem:[#allocation4 + $0xd8] sm:$0xff]
    %v451 = vld [vmem:[#allocation4 + $0xe0] sm:$0xff]
    %v452 = vld [vmem:[#allocation4 + $0xe8] sm:$0xff]
    %v453 = vld [vmem:[#allocation4 + $0xf0] sm:$0xff]
    %v454 = vld [vmem:[#allocation4 + $0xf8] sm:$0xff]
    %v455 = vld [vmem:[%s6] sm:$0x3]
    %v457 = vlaneseq
    %v458 = vshrl.u32 %v457, 7
    %v459 = vsub.s32 0, %v458
    %v460 = vrot.slane %v455, %v459
    %v461 = vlaneseq
    %v462 = vshrl.u32 %v461, 7
    %v463 = vsub.s32 1, %v462
    %v464 = vrot.slane %v455, %v463
    %v499 = vunpack.c.l.b16 %v423
    %v500 = vunpack.c.h.b16 %v423
    %v501 = vunpack.c.l.b16 %v424
    %v502 = vunpack.c.h.b16 %v424
    %v503 = vunpack.c.l.b16 %v425
    %v504 = vunpack.c.h.b16 %v425
    %v505 = vunpack.c.l.b16 %v426
    %v506 = vunpack.c.h.b16 %v426
    %v507 = vunpack.c.l.b16 %v427
    %v508 = vunpack.c.h.b16 %v427
    %v509 = vunpack.c.l.b16 %v428
    %v510 = vunpack.c.h.b16 %v428
    %v511 = vunpack.c.l.b16 %v429
    %v512 = vunpack.c.h.b16 %v429
    %v513 = vunpack.c.l.b16 %v430
    %v514 = vunpack.c.h.b16 %v430
    %v515 = vunpack.c.l.b16 %v431
    %v516 = vunpack.c.h.b16 %v431
    %v517 = vunpack.c.l.b16 %v432
    %v518 = vunpack.c.h.b16 %v432
    %v519 = vunpack.c.l.b16 %v433
    %v520 = vunpack.c.h.b16 %v433
    %v521 = vunpack.c.l.b16 %v434
    %v522 = vunpack.c.h.b16 %v434
    %v523 = vunpack.c.l.b16 %v435
    %v524 = vunpack.c.h.b16 %v435
    %v525 = vunpack.c.l.b16 %v436
    %v526 = vunpack.c.h.b16 %v436
    %v527 = vunpack.c.l.b16 %v437
    %v528 = vunpack.c.h.b16 %v437
    %v529 = vunpack.c.l.b16 %v438
    %v530 = vunpack.c.h.b16 %v438
    %v531 = vunpack.c.l.b16 %v439
    %v532 = vunpack.c.h.b16 %v439
    %v533 = vunpack.c.l.b16 %v440
    %v534 = vunpack.c.h.b16 %v440
    %v535 = vunpack.c.l.b16 %v441
    %v536 = vunpack.c.h.b16 %v441
    %v537 = vunpack.c.l.b16 %v442
    %v538 = vunpack.c.h.b16 %v442
    %v539 = vunpack.c.l.b16 %v443
    %v540 = vunpack.c.h.b16 %v443
    %v541 = vunpack.c.l.b16 %v444
    %v542 = vunpack.c.h.b16 %v444
    %v543 = vunpack.c.l.b16 %v445
    %v544 = vunpack.c.h.b16 %v445
    %v545 = vunpack.c.l.b16 %v446
    %v546 = vunpack.c.h.b16 %v446
    %v547 = vunpack.c.l.b16 %v447
    %v548 = vunpack.c.h.b16 %v447
    %v549 = vunpack.c.l.b16 %v448
    %v550 = vunpack.c.h.b16 %v448
    %v551 = vunpack.c.l.b16 %v449
    %v552 = vunpack.c.h.b16 %v449
    %v553 = vunpack.c.l.b16 %v450
    %v554 = vunpack.c.h.b16 %v450
    %v555 = vunpack.c.l.b16 %v451
    %v556 = vunpack.c.h.b16 %v451
    %v557 = vunpack.c.l.b16 %v452
    %v558 = vunpack.c.h.b16 %v452
    %v559 = vunpack.c.l.b16 %v453
    %v560 = vunpack.c.h.b16 %v453
    %v561 = vunpack.c.l.b16 %v454
    %v562 = vunpack.c.h.b16 %v454
    %v563 = vpack.c.b16 %v501, %v499
    %v564 = vpack.c.b16 %v502, %v500
    %v565 = vpack.c.b16 %v505, %v503
    %v566 = vpack.c.b16 %v506, %v504
    %v567 = vpack.c.b16 %v509, %v507
    %v568 = vpack.c.b16 %v510, %v508
    %v569 = vpack.c.b16 %v513, %v511
    %v570 = vpack.c.b16 %v514, %v512
    %v571 = vpack.c.b16 %v517, %v515
    %v572 = vpack.c.b16 %v518, %v516
    %v573 = vpack.c.b16 %v521, %v519
    %v574 = vpack.c.b16 %v522, %v520
    %v575 = vpack.c.b16 %v525, %v523
    %v576 = vpack.c.b16 %v526, %v524
    %v577 = vpack.c.b16 %v529, %v527
    %v578 = vpack.c.b16 %v530, %v528
    %v579 = vpack.c.b16 %v533, %v531
    %v580 = vpack.c.b16 %v534, %v532
    %v581 = vpack.c.b16 %v537, %v535
    %v582 = vpack.c.b16 %v538, %v536
    %v583 = vpack.c.b16 %v541, %v539
    %v584 = vpack.c.b16 %v542, %v540
    %v585 = vpack.c.b16 %v545, %v543
    %v586 = vpack.c.b16 %v546, %v544
    %v587 = vpack.c.b16 %v549, %v547
    %v588 = vpack.c.b16 %v550, %v548
    %v589 = vpack.c.b16 %v553, %v551
    %v590 = vpack.c.b16 %v554, %v552
    %v591 = vpack.c.b16 %v557, %v555
    %v592 = vpack.c.b16 %v558, %v556
    %v593 = vpack.c.b16 %v561, %v559
    %v594 = vpack.c.b16 %v562, %v560
    %627 = vmatprep.subr.bf16.mxu0 %v564
    %628 = vmatpush1.bf16.msra.mxu0 %v563
    %629 = vmatprep.subr.bf16.mxu0 %v566
    %630 = vmatpush1.bf16.msra.mxu0 %v565
    %631 = vmatprep.subr.bf16.mxu0 %v568
    %632 = vmatpush1.bf16.msra.mxu0 %v567
    %633 = vmatprep.subr.bf16.mxu0 %v570
    %634 = vmatpush1.bf16.msra.mxu0 %v569
    %635 = vmatprep.subr.bf16.mxu0 %v572
    %636 = vmatpush1.bf16.msra.mxu0 %v571
    %637 = vmatprep.subr.bf16.mxu0 %v574
    %638 = vmatpush1.bf16.msra.mxu0 %v573
    %639 = vmatprep.subr.bf16.mxu0 %v576
    %640 = vmatpush1.bf16.msra.mxu0 %v575
    %641 = vmatprep.subr.bf16.mxu0 %v578
    %642 = vmatpush1.bf16.msra.mxu0 %v577
    %643 = vmatprep.subr.bf16.mxu0 %v580
    %644 = vmatpush1.bf16.msra.mxu0 %v579
    %645 = vmatprep.subr.bf16.mxu0 %v582
    %646 = vmatpush1.bf16.msra.mxu0 %v581
    %647 = vmatprep.subr.bf16.mxu0 %v584
    %648 = vmatpush1.bf16.msra.mxu0 %v583
    %649 = vmatprep.subr.bf16.mxu0 %v586
    %650 = vmatpush1.bf16.msra.mxu0 %v585
    %651 = vmatprep.subr.bf16.mxu0 %v588
    %652 = vmatpush1.bf16.msra.mxu0 %v587
    %653 = vmatprep.subr.bf16.mxu0 %v590
    %654 = vmatpush1.bf16.msra.mxu0 %v589
    %655 = vmatprep.subr.bf16.mxu0 %v592
    %656 = vmatpush1.bf16.msra.mxu0 %v591
    %657 = vmatprep.subr.bf16.mxu0 %v594
    %658 = vmatpush1.bf16.msra.mxu0 %v593
    %659 = vmatprep.mubr.bf16.mxu0 %v422
    %660 = vmatmul.mubr.bf16.gmra.mrb[0].mxu0 %v421
    %v661 = vpop.f32.mrb[0].mxu0
    %v662 = vadd.f32 %v460, %v661
    %v663 = vpop.f32.mrb[0].mxu0
    %v664 = vadd.f32 %v464, %v663
    %v665 = vpop.f32.mrb[0].mxu0
    %v666 = vadd.f32 %v460, %v665
    %v667 = vpop.f32.mrb[0].mxu0
    %v668 = vadd.f32 %v464, %v667
    %669 = vdwg.mxu0
    %v670 = vmax.f32 %v662, 0.0
    %v671 = vmax.f32 %v664, 0.0
    %v672 = vmax.f32 %v666, 0.0
    %v673 = vmax.f32 %v668, 0.0
    %v674 = vpack.c.bf16 %v672, %v670
    %v675 = vpack.c.bf16 %v673, %v671
    %v676 = vld [vmem:[#allocation6] sm:$0xf]
    %v677 = vld [vmem:[#allocation6 + $0x4] sm:$0xf]
    %v678 = vld [vmem:[#allocation6 + $0x8] sm:$0xf]
    %v679 = vld [vmem:[#allocation6 + $0xc] sm:$0xf]
    %v680 = vld [vmem:[#allocation6 + $0x10] sm:$0xf]
    %v681 = vld [vmem:[#allocation6 + $0x14] sm:$0xf]
    %v682 = vld [vmem:[#allocation6 + $0x18] sm:$0xf]
    %v683 = vld [vmem:[#allocation6 + $0x1c] sm:$0xf]
    %v684 = vld [vmem:[#allocation6 + $0x20] sm:$0xf]
    %v685 = vld [vmem:[#allocation6 + $0x24] sm:$0xf]
    %v686 = vld [vmem:[#allocation6 + $0x28] sm:$0xf]
    %v687 = vld [vmem:[#allocation6 + $0x2c] sm:$0xf]
    %v688 = vld [vmem:[#allocation6 + $0x30] sm:$0xf]
    %v689 = vld [vmem:[#allocation6 + $0x34] sm:$0xf]
    %v690 = vld [vmem:[#allocation6 + $0x38] sm:$0xf]
    %v691 = vld [vmem:[#allocation6 + $0x3c] sm:$0xf]
    %v692 = vld [vmem:[#allocation6 + $0x40] sm:$0xf]
    %v693 = vld [vmem:[#allocation6 + $0x44] sm:$0xf]
    %v694 = vld [vmem:[#allocation6 + $0x48] sm:$0xf]
    %v695 = vld [vmem:[#allocation6 + $0x4c] sm:$0xf]
    %v696 = vld [vmem:[#allocation6 + $0x50] sm:$0xf]
    %v697 = vld [vmem:[#allocation6 + $0x54] sm:$0xf]
    %v698 = vld [vmem:[#allocation6 + $0x58] sm:$0xf]
    %v699 = vld [vmem:[#allocation6 + $0x5c] sm:$0xf]
    %v700 = vld [vmem:[#allocation6 + $0x60] sm:$0xf]
    %v701 = vld [vmem:[#allocation6 + $0x64] sm:$0xf]
    %v702 = vld [vmem:[#allocation6 + $0x68] sm:$0xf]
    %v703 = vld [vmem:[#allocation6 + $0x6c] sm:$0xf]
    %v704 = vld [vmem:[#allocation6 + $0x70] sm:$0xf]
    %v705 = vld [vmem:[#allocation6 + $0x74] sm:$0xf]
    %v706 = vld [vmem:[#allocation6 + $0x78] sm:$0xf]
    %v707 = vld [vmem:[#allocation6 + $0x7c] sm:$0xf]
    %v708 = vld [vmem:[%s8] sm:$0x1]
    %v710 = vlaneseq
    %v711 = vshrl.u32 %v710, 7
    %v712 = vsub.s32 0, %v711
    %v713 = vrot.slane %v708, %v712
    %v747 = vunpack.c.l.b16 %v676
    %v748 = vunpack.c.l.b16 %v677
    %v749 = vunpack.c.l.b16 %v678
    %v750 = vunpack.c.l.b16 %v679
    %v751 = vunpack.c.l.b16 %v680
    %v752 = vunpack.c.l.b16 %v681
    %v753 = vunpack.c.l.b16 %v682
    %v754 = vunpack.c.l.b16 %v683
    %v755 = vunpack.c.l.b16 %v684
    %v756 = vunpack.c.l.b16 %v685
    %v757 = vunpack.c.l.b16 %v686
    %v758 = vunpack.c.l.b16 %v687
    %v759 = vunpack.c.l.b16 %v688
    %v760 = vunpack.c.l.b16 %v689
    %v761 = vunpack.c.l.b16 %v690
    %v762 = vunpack.c.l.b16 %v691
    %v763 = vunpack.c.l.b16 %v692
    %v764 = vunpack.c.l.b16 %v693
    %v765 = vunpack.c.l.b16 %v694
    %v766 = vunpack.c.l.b16 %v695
    %v767 = vunpack.c.l.b16 %v696
    %v768 = vunpack.c.l.b16 %v697
    %v769 = vunpack.c.l.b16 %v698
    %v770 = vunpack.c.l.b16 %v699
    %v771 = vunpack.c.l.b16 %v700
    %v772 = vunpack.c.l.b16 %v701
    %v773 = vunpack.c.l.b16 %v702
    %v774 = vunpack.c.l.b16 %v703
    %v775 = vunpack.c.l.b16 %v704
    %v776 = vunpack.c.l.b16 %v705
    %v777 = vunpack.c.l.b16 %v706
    %v778 = vunpack.c.l.b16 %v707
    %v779 = vpack.c.b16 %v748, %v747
    %v780 = vpack.c.b16 %v750, %v749
    %v781 = vpack.c.b16 %v752, %v751
    %v782 = vpack.c.b16 %v754, %v753
    %v783 = vpack.c.b16 %v756, %v755
    %v784 = vpack.c.b16 %v758, %v757
    %v785 = vpack.c.b16 %v760, %v759
    %v786 = vpack.c.b16 %v762, %v761
    %v787 = vpack.c.b16 %v764, %v763
    %v788 = vpack.c.b16 %v766, %v765
    %v789 = vpack.c.b16 %v768, %v767
    %v790 = vpack.c.b16 %v770, %v769
    %v791 = vpack.c.b16 %v772, %v771
    %v792 = vpack.c.b16 %v774, %v773
    %v793 = vpack.c.b16 %v776, %v775
    %v794 = vpack.c.b16 %v778, %v777
    %811 = vmatprep.subr.bf16.mxu0 0
    %812 = vmatpush1.bf16.msra.mxu0 %v779
    %813 = vmatprep.subr.bf16.mxu0 0
    %814 = vmatpush1.bf16.msra.mxu0 %v780
    %815 = vmatprep.subr.bf16.mxu0 0
    %816 = vmatpush1.bf16.msra.mxu0 %v781
    %817 = vmatprep.subr.bf16.mxu0 0
    %818 = vmatpush1.bf16.msra.mxu0 %v782
    %819 = vmatprep.subr.bf16.mxu0 0
    %820 = vmatpush1.bf16.msra.mxu0 %v783
    %821 = vmatprep.subr.bf16.mxu0 0
    %822 = vmatpush1.bf16.msra.mxu0 %v784
    %823 = vmatprep.subr.bf16.mxu0 0
    %824 = vmatpush1.bf16.msra.mxu0 %v785
    %825 = vmatprep.subr.bf16.mxu0 0
    %826 = vmatpush1.bf16.msra.mxu0 %v786
    %827 = vmatprep.subr.bf16.mxu0 0
    %828 = vmatpush1.bf16.msra.mxu0 %v787
    %829 = vmatprep.subr.bf16.mxu0 0
    %830 = vmatpush1.bf16.msra.mxu0 %v788
    %831 = vmatprep.subr.bf16.mxu0 0
    %832 = vmatpush1.bf16.msra.mxu0 %v789
    %833 = vmatprep.subr.bf16.mxu0 0
    %834 = vmatpush1.bf16.msra.mxu0 %v790
    %835 = vmatprep.subr.bf16.mxu0 0
    %836 = vmatpush1.bf16.msra.mxu0 %v791
    %837 = vmatprep.subr.bf16.mxu0 0
    %838 = vmatpush1.bf16.msra.mxu0 %v792
    %839 = vmatprep.subr.bf16.mxu0 0
    %840 = vmatpush1.bf16.msra.mxu0 %v793
    %841 = vmatprep.subr.bf16.mxu0 0
    %842 = vmatpush1.bf16.msra.mxu0 %v794
    %843 = vmatprep.mubr.bf16.mxu0 %v675
    %844 = vmatmul.mubr.bf16.gmra.mrb[0].mxu0 %v674
    %v845 = vpop.f32.mrb[0].mxu0
    %v846 = vadd.f32 %v713, %v845
    %v847 = vpop.f32.mrb[0].mxu0
    %v848 = vpop.f32.mrb[0].mxu0
    %v849 = vadd.f32 %v713, %v848
    %v850 = vpop.f32.mrb[0].mxu0
    %851 = vdwg.mxu0
    %v852 = vmul.f32 %v846, 0.5
    %v853 = vmul.f32 %v849, 0.5
    %v854 = vtanh.pop %v852
    %v855 = vtanh.pop %v853
    %v856 = vmul.f32 %v854, 0.5
    %v857 = vmul.f32 %v855, 0.5
    %v858 = vadd.f32 %v856, 0.5
    %v859 = vadd.f32 %v857, 0.5
    %v860 = vpack.c.bf16 %v859, %v858
    %v862 = vunpack.c.l.b16 %v860
    %v863 = vunpack.c.h.b16 %v860
    %v864 = vpack.c.b16 %v862, %v862
    %v865 = vpack.c.b16 %v863, %v863
    %868 = vst [vmem:[%s9] sm:$0xf] %v864
    %869 = vst [vmem:[%s9 + $0x4] sm:$0xf] %v865
    // Predicated region
    $region50: #{discriminator_forward.1} parent=1 // pred_check
      _
    $region51: #{discriminator_forward.1} parent=1 // pred_check_branch
      %871 = sbr.rel (0) target = $region53
    $region52: #{discriminator_forward.1} parent=1 // pred_region
      _
    $region53: #{discriminator_forward.1} parent=1 // pred_fallthru
      _
    // Predicated region
    $region54: #{discriminator_forward.1} parent=1 // pred_check
      _
    $region55: #{discriminator_forward.1} parent=1 // pred_check_branch
      %873 = sbr.rel (0) target = $region57
    $region56: #{discriminator_forward.1} parent=1 // pred_region
      _
    $region57: #{discriminator_forward.1} parent=1 // pred_fallthru
      _
    %874 = vsyncpa [#allocation3], 1
    %875 = vsyncpa [#allocation5], 1

</llo_original>
